<compile_context>
chip_gen: v7x
topology: tpu7x:2x2x1
jax: 0.10.0
libtpu: 0.0.40
codegen_flags: <defaults>
</compile_context>

<pallas_src>
import functools

import jax
import jax.numpy as jnp
from jax.experimental import pallas as pl
from jax.experimental.pallas import tpu as pltpu


def _round_up(x, m):
    return (x + m - 1) // m * m


def _silu(x):
    # Llama config.hidden_act == "silu" -> ACT2FN["silu"] (the gelu branch of the
    # module is never taken for Llama).
    return x * jax.nn.sigmoid(x)


def llama_mlp_kernel(x_ref, wgu_ref, wd_ref, o_ref, acc_ref, *, ti):
    """Per grid step: one intermediate-dim tile of the fused gate|up projection,
    SiLU-gating, and its contribution to the down projection, accumulated in f32."""
    i = pl.program_id(1)

    @pl.when(i == 0)
    def _():
        acc_ref[...] = jnp.zeros_like(acc_ref)

    x = x_ref[...]                                                        # [tm, H]
    # Fused gate|up matmul: one weight stream, one MXU push over the same x tile.
    gu = jnp.dot(x, wgu_ref[...], preferred_element_type=jnp.float32)     # [tm, 2*ti]
    gate = gu[:, :ti]
    up = gu[:, ti:]
    h = _silu(gate) * up                                                  # [tm, ti] f32
    acc_ref[...] += jnp.dot(h.astype(wd_ref.dtype), wd_ref[...],
                            preferred_element_type=jnp.float32)           # [tm, H]

    @pl.when(i == pl.num_programs(1) - 1)
    def _():
        o_ref[...] = acc_ref[...].astype(o_ref.dtype)


def _working_set_bytes(tm, ti, H, itemsize):
    # Double-buffered pipelined operands + resident f32 accumulator.
    x_b = 2 * tm * H * itemsize
    wgu_b = 2 * H * (2 * ti) * itemsize
    wd_b = 2 * ti * H * itemsize
    out_b = 2 * tm * H * itemsize
    acc_b = tm * H * 4
    return x_b + wgu_b + wd_b + out_b + acc_b


def _pick_tiles(T, H, I, itemsize, budget_bytes=40 << 20):
    """Pick (tm, ti). Budget keeps the working set within ~40 MiB so the same
    config is safe on v7x (64 MiB VMEM/TC) as well as v5e/v6e (128 MiB)."""
    sublane = 8 if itemsize >= 4 else 16
    # Token tile: cover small (decode) T exactly so weights stream from HBM once;
    # cap at 256 so prefill tiles are full MXU height.
    # TODO(synk): on v7x, consider capping tm at T//2 when 256 <= T < 512 so both
    # TensorCores get a token block along the "parallel" axis.
    tm = min(_round_up(T, sublane), 256)
    # Intermediate tile: largest lane-aligned divisor of I that fits the budget.
    for ti in (1024, 512, 256, 128):
        if I % ti == 0 and _working_set_bytes(tm, ti, H, itemsize) <= budget_bytes:
            return tm, ti
    # Fallback for very large H: shrink the token tile.
    while tm > sublane and _working_set_bytes(tm, 128, H, itemsize) > budget_bytes:
        tm //= 2
    return max(tm, sublane), 128


def _fuse_gate_up(w_gate, w_up, ti):
    """Interleave gate/up column blocks so grid step i reads one contiguous
    [H, 2*ti] slab = [gate_block_i | up_block_i]. In a serving path this is done
    once at weight-load time."""
    H, I = w_gate.shape
    n = I // ti
    wg = w_gate.reshape(H, n, ti)
    wu = w_up.reshape(H, n, ti)
    return jnp.concatenate([wg, wu], axis=2).reshape(H, 2 * I)


def llama_mlp(x, w_gate, w_up, w_down):
    """x: [T, H]; w_gate, w_up: [H, I]; w_down: [I, H] -> out: [T, H]."""
    T, H = x.shape
    I = w_gate.shape[1]
    itemsize = jnp.dtype(x.dtype).itemsize

    # Pad the intermediate dim to a lane multiple; zero gate columns -> silu(0)*up = 0,
    # zero down-proj rows -> zero contribution, so padding is exact.
    I_pad = _round_up(I, 128)
    if I_pad != I:
        pad_i = I_pad - I
        w_gate = jnp.pad(w_gate, ((0, 0), (0, pad_i)))
        w_up = jnp.pad(w_up, ((0, 0), (0, pad_i)))
        w_down = jnp.pad(w_down, ((0, pad_i), (0, 0)))

    tm, ti = _pick_tiles(T, H, I_pad, itemsize)

    # Pad tokens up to a multiple of tm; padded rows produce zeros and are sliced off.
    T_pad = _round_up(T, tm)
    if T_pad != T:
        x = jnp.pad(x, ((0, T_pad - T), (0, 0)))

    w_gu = _fuse_gate_up(w_gate, w_up, ti)

    grid = (T_pad // tm, I_pad // ti)
    vmem_limit = min(max(_working_set_bytes(tm, ti, H, itemsize) + (8 << 20),
                         32 << 20), 56 << 20)

    out = pl.pallas_call(
        functools.partial(llama_mlp_kernel, ti=ti),
        out_shape=jax.ShapeDtypeStruct((T_pad, H), x.dtype),
        grid_spec=pltpu.PrefetchScalarGridSpec(
            num_scalar_prefetch=0,
            grid=grid,
            in_specs=[
                pl.BlockSpec((tm, H), lambda t, i: (t, 0)),        # activations tile
                pl.BlockSpec((H, 2 * ti), lambda t, i: (0, i)),    # fused gate|up weights
                pl.BlockSpec((ti, H), lambda t, i: (i, 0)),        # down-proj weights
            ],
            out_specs=pl.BlockSpec((tm, H), lambda t, i: (t, 0)),
            scratch_shapes=[pltpu.VMEM((tm, H), jnp.float32)],
        ),
        compiler_params=pltpu.CompilerParams(
            dimension_semantics=("parallel", "arbitrary"),
            vmem_limit_bytes=vmem_limit,
        ),
    )(x, w_gu, w_down)

    return out[:T] if T_pad != T else out


def llama_mlp_ref(x, w_gate, w_up, w_down):
    # Mirrors the PyTorch forward:
    #   gate_up = x @ cat([Wg, Wu], dim=0).T ; view(-1, 2, I)
    #   out = (silu(gate_up[:,0]) * gate_up[:,1]) @ Wd.T
    gate = x @ w_gate
    up = x @ w_up
    return (_silu(gate) * up) @ w_down


if __name__ == "__main__":
    key = jax.random.PRNGKey(0)
    kx, kg, ku, kd = jax.random.split(key, 4)

    mlp = jax.jit(llama_mlp)

    # ---- Test 1: f32, ragged token count and non-128-multiple intermediate size
    # (exercises both padding paths: T=12 -> 16, I=352 -> 384).
    T, H, I = 12, 256, 352
    x = jax.random.normal(kx, (T, H), dtype=jnp.float32) * 0.5
    w_gate = jax.random.normal(kg, (H, I), dtype=jnp.float32) * 0.02
    w_up = jax.random.normal(ku, (H, I), dtype=jnp.float32) * 0.02
    w_down = jax.random.normal(kd, (I, H), dtype=jnp.float32) * 0.02

    out = jax.block_until_ready(mlp(x, w_gate, w_up, w_down))
    ref = llama_mlp_ref(x, w_gate, w_up, w_down)
    assert out.shape == (T, H)
    assert jnp.allclose(out, ref, atol=1e-4, rtol=1e-3)

    # ---- Test 2: bf16 weights/activations, small prefill-like shape.
    T2, H2, I2 = 64, 256, 512
    kx2, kg2, ku2, kd2 = jax.random.split(jax.random.PRNGKey(1), 4)
    x2 = (jax.random.normal(kx2, (T2, H2), dtype=jnp.float32) * 0.5).astype(jnp.bfloat16)
    wg2 = (jax.random.normal(kg2, (H2, I2), dtype=jnp.float32) * 0.02).astype(jnp.bfloat16)
    wu2 = (jax.random.normal(ku2, (H2, I2), dtype=jnp.float32) * 0.02).astype(jnp.bfloat16)
    wd2 = (jax.random.normal(kd2, (I2, H2), dtype=jnp.float32) * 0.02).astype(jnp.bfloat16)

    out2 = jax.block_until_ready(mlp(x2, wg2, wu2, wd2))
    ref2 = llama_mlp_ref(x2.astype(jnp.float32), wg2.astype(jnp.float32),
                         wu2.astype(jnp.float32), wd2.astype(jnp.float32))
    assert out2.shape == (T2, H2)
    assert jnp.allclose(out2.astype(jnp.float32), ref2, atol=5e-3, rtol=5e-2)

    print("KERNEL_OK")
</pallas_src>

<mosaic_0001>
module attributes {stable_mosaic.version = 11 : i64} {
  func.func @llama_mlp_kernel(%arg0: i32, %arg1: i32, %arg2: memref<16x256xf32, #tpu.memory_space<vmem>>, %arg3: memref<256x256xf32, #tpu.memory_space<vmem>>, %arg4: memref<128x256xf32, #tpu.memory_space<vmem>>, %arg5: memref<16x256xf32, #tpu.memory_space<vmem>>, %arg6: memref<16x256xf32, #tpu.memory_space<vmem>>) attributes {dimension_semantics = [#tpu.dimension_semantics<parallel>, #tpu.dimension_semantics<arbitrary>], iteration_bounds = array<i64: 1, 3>, scalar_prefetch = 0 : i64, scratch_operands = 1 : i64, tpu.core_type = #tpu.core_type<tc>, window_params = [{transform_indices = @transform_0, window_bounds = array<i64: 16, 256>}, {transform_indices = @transform_1, window_bounds = array<i64: 256, 256>}, {transform_indices = @transform_2, window_bounds = array<i64: 128, 256>}, {transform_indices = @transform_3, window_bounds = array<i64: 16, 256>}]} {
    %c0_i32 = arith.constant 0 : i32
    %0 = arith.cmpi eq, %arg1, %c0_i32 : i32
    %1 = arith.extui %0 : i1 to i32
    %c0_i32_0 = arith.constant 0 : i32
    %2 = arith.cmpi ne, %1, %c0_i32_0 : i32
    scf.if %2 {
      %cst_13 = arith.constant 0.000000e+00 : f32
      %23 = vector.broadcast %cst_13 : f32 to vector<16x256xf32>
      %c0_14 = arith.constant 0 : index
      %c0_15 = arith.constant 0 : index
      %24 = vector.load %arg6[%c0_14, %c0_15] : memref<16x256xf32, #tpu.memory_space<vmem>>, vector<16x256xf32>
      tpu.vector_store %arg6[%c0_14, %c0_15], %23 {strides = array<i32>} : memref<16x256xf32, #tpu.memory_space<vmem>>, vector<16x256xf32>,
    } else {
    }
    %c0 = arith.constant 0 : index
    %c0_1 = arith.constant 0 : index
    %3 = vector.load %arg2[%c0, %c0_1] : memref<16x256xf32, #tpu.memory_space<vmem>>, vector<16x256xf32>
    %c0_2 = arith.constant 0 : index
    %c0_3 = arith.constant 0 : index
    %4 = vector.load %arg3[%c0_2, %c0_3] : memref<256x256xf32, #tpu.memory_space<vmem>>, vector<256x256xf32>
    %cst = arith.constant dense<0.000000e+00> : vector<16x256xf32>
    %5 = tpu.matmul %3, %4, %cst {dimension_numbers = #tpu.dot_dimension_numbers<[1], [0], [0], [1], [0, 0, 1, 1], [], []>} : vector<16x256xf32>, vector<256x256xf32>, vector<16x256xf32> -> vector<16x256xf32>
    %6 = vector.extract_strided_slice %5 {offsets = [0, 0], sizes = [16, 128], strides = [1, 1]} : vector<16x256xf32> to vector<16x128xf32>
    %7 = vector.extract_strided_slice %5 {offsets = [0, 128], sizes = [16, 128], strides = [1, 1]} : vector<16x256xf32> to vector<16x128xf32>
    %8 = arith.negf %6 : vector<16x128xf32>
    %9 = math.exp %8 : vector<16x128xf32>
    %cst_4 = arith.constant 1.000000e+00 : f32
    %10 = vector.broadcast %cst_4 : f32 to vector<16x128xf32>
    %11 = arith.addf %10, %9 : vector<16x128xf32>
    %12 = arith.divf %10, %11 : vector<16x128xf32>
    %13 = arith.mulf %6, %12 : vector<16x128xf32>
    %14 = arith.mulf %13, %7 : vector<16x128xf32>
    %c0_5 = arith.constant 0 : index
    %c0_6 = arith.constant 0 : index
    %15 = vector.load %arg6[%c0_5, %c0_6] : memref<16x256xf32, #tpu.memory_space<vmem>>, vector<16x256xf32>
    %c0_7 = arith.constant 0 : index
    %c0_8 = arith.constant 0 : index
    %16 = vector.load %arg4[%c0_7, %c0_8] : memref<128x256xf32, #tpu.memory_space<vmem>>, vector<128x256xf32>
    %cst_9 = arith.constant dense<0.000000e+00> : vector<16x256xf32>
    %17 = tpu.matmul %14, %16, %cst_9 {dimension_numbers = #tpu.dot_dimension_numbers<[1], [0], [0], [1], [0, 0, 1, 1], [], []>} : vector<16x128xf32>, vector<128x256xf32>, vector<16x256xf32> -> vector<16x256xf32>
    %18 = arith.addf %15, %17 : vector<16x256xf32>
    %c0_10 = arith.constant 0 : index
    %c0_11 = arith.constant 0 : index
    %19 = vector.load %arg6[%c0_10, %c0_11] : memref<16x256xf32, #tpu.memory_space<vmem>>, vector<16x256xf32>
    tpu.vector_store %arg6[%c0_10, %c0_11], %18 {strides = array<i32>} : memref<16x256xf32, #tpu.memory_space<vmem>>, vector<16x256xf32>,
    %c2_i32 = arith.constant 2 : i32
    %20 = arith.cmpi eq, %arg1, %c2_i32 : i32
    %21 = arith.extui %20 : i1 to i32
    %c0_i32_12 = arith.constant 0 : i32
    %22 = arith.cmpi ne, %21, %c0_i32_12 : i32
    scf.if %22 {
      %c0_13 = arith.constant 0 : index
      %c0_14 = arith.constant 0 : index
      %23 = vector.load %arg6[%c0_13, %c0_14] : memref<16x256xf32, #tpu.memory_space<vmem>>, vector<16x256xf32>
      %c0_15 = arith.constant 0 : index
      %c0_16 = arith.constant 0 : index
      %24 = vector.load %arg5[%c0_15, %c0_16] : memref<16x256xf32, #tpu.memory_space<vmem>>, vector<16x256xf32>
      tpu.vector_store %arg5[%c0_15, %c0_16], %23 {strides = array<i32>} : memref<16x256xf32, #tpu.memory_space<vmem>>, vector<16x256xf32>,
    } else {
    }
    return
  }
  func.func @transform_0(%arg0: i32, %arg1: i32) -> (i32, i32) {
    %c0_i32 = arith.constant 0 : i32
    %c0_i32_0 = arith.constant 0 : i32
    return %arg0, %c0_i32 : i32, i32
  }
  func.func @transform_1(%arg0: i32, %arg1: i32) -> (i32, i32) {
    %c0_i32 = arith.constant 0 : i32
    %c0_i32_0 = arith.constant 0 : i32
    return %c0_i32, %arg1 : i32, i32
  }
  func.func @transform_2(%arg0: i32, %arg1: i32) -> (i32, i32) {
    %c0_i32 = arith.constant 0 : i32
    %c0_i32_0 = arith.constant 0 : i32
    return %arg1, %c0_i32 : i32, i32
  }
  func.func @transform_3(%arg0: i32, %arg1: i32) -> (i32, i32) {
    %c0_i32 = arith.constant 0 : i32
    %c0_i32_0 = arith.constant 0 : i32
    return %arg0, %c0_i32 : i32, i32
  }
}

</mosaic_0001>

<llo_original>
// kernel: llama_mlp.1
$region0: #{llama_mlp.1}
  #allocation0 [shape = 'u32[]', space=smem, size = 0x4, offset = 0x4, fixed_abs, tag = 'smem constant byte address 0x4 - core index']
  #allocation1 [shape = 'u32[144,128]{1,0:T(1,128)}', space=vmem, size = 0x12000, scoped, tag = 'internal scratch']
  #allocation2 [shape = 'f32[16,256]{1,0:T(8,128)}', space=vmem, size = 0x4000, scoped, tag = 'scratch operand']
  %s0 = inlined_call_operand.vmem [shape: f32[16,256], index: 0, kind: input, shape index: {}]
  %s1 = inlined_call_operand.vmem [shape: f32[256,768], index: 1, kind: input, shape index: {}]
  %s2 = inlined_call_operand.vmem [shape: f32[384,256], index: 2, kind: input, shape index: {}]
  %s3 = inlined_call_operand.hbm [shape: f32[16,256], index: 3, kind: output, shape index: {}]
  %s4 = sld [smem:[#allocation0]]
  $region76: #{llama_mlp.1} parent=0
    _
  %s6 = ssub.s32 1, %s4
  %s7 = scalar_select 0, %s6, %s4
  $region1: #{llama_mlp.1} parent=0
    #allocation3 [shape = 'u8[524288]{0}', space=vmem, size = 0x80000, scoped, tag = 'input window, operand 1']
    #allocation4 [shape = 'u8[16384]{0}', space=vmem, size = 0x4000, scoped, tag = 'output window, operand 0, single buffered']
    #allocation5 [shape = 's32[2]{0}', space=sflag, size = 0x8, scoped, tag = 'scoped memory for llama_mlp.1']
    %8 = vsyncpa [#allocation5], 0
    loop: start=0, step=1, limit=5
    $region2: #{llama_mlp.1} parent=1 // loop_pre_header
      _
    $region3: #{llama_mlp.1} parent=1 // loop_header
      %s10 = sphi 0, %s14
      %p11 = scmp.ge.s32.totalorder %s10, 5
      %s17 = sphi 0, %s29
      %s18 = sphi 0, %s25
      %s19 = sphi 0, %s17
      %s20 = sphi 0, %s18
      %s21 = sphi 0, %s19
      %s22 = sphi 0, %s20
      %s32 = sphi 0, %s34
      %s35 = sphi 0, %s32
      %s36 = sphi 0, %s35
      %s52 = sphi 0, %s36
      %s58 = sphi 0, %s60
      %s61 = sphi 0, %s58
      %s62 = sphi 0, %s61
      %s78 = sphi 0, %s62
      %s84 = sphi 0, %s86
      %s87 = sphi 0, %s84
      %s88 = sphi 0, %s87
      %s104 = sphi 0, %s88
      %s110 = sphi 0, %s112
      %s113 = sphi 0, %s110
      %s114 = sphi 0, %s113
      %s130 = sphi 0, %s114
    $region4: #{llama_mlp.1} parent=1 // loop_header_branch
      %13 = sbr.rel (%p11) target = $region8
    $region5: #{llama_mlp.1} parent=1 // loop_body
      %s15 = ssub.s32 %s10, 1
      %s16 = ssub.s32 %s10, 2
      %s23 = sadd.s32 1, %s18
      %p24 = scmp.ge.s32.totalorder %s23, 3
      %s25 = scalar_select %p24, 0, %s23
      %s26 = sadd.s32 1, %s17
      %s27 = scalar_select %p24, %s26, %s17
      %p28 = scmp.ge.s32.totalorder %s27, 1
      %s29 = scalar_select %p28, 0, %s27
      %s30 = ssub.s32 %s17, %s29
      %p31 = scmp.eq.s32.totalorder %s30, 0
      %s33 = sadd.s32 %s32, 1
      %s34 = scalar_select %p31, %s32, %s33
      %p37 = pneg %p31
      %p38 = scmp.eq.s32.totalorder %s10, 2
      %p39 = por %p37, %p38
      %p40 = scmp.ne.s32.totalorder %s32, %s35
      %p41 = scmp.eq.s32.totalorder %s10, 0
      %p42 = por %p40, %p41
      %p43 = scmp.ne.s32.totalorder %s32, %s35
      %p44 = scmp.eq.s32.totalorder %s15, 2
      %p45 = por %p43, %p44
      %p46 = scmp.ne.s32.totalorder %s35, %s36
      %p47 = scmp.eq.s32.totalorder %s15, 0
      %p48 = por %p46, %p47
      %p49 = scmp.ne.s32.totalorder %s35, %s36
      %p50 = scmp.eq.s32.totalorder %s16, 2
      %p51 = por %p49, %p50
      %p53 = scmp.ne.s32.totalorder %s36, %s52
      %p54 = scmp.eq.s32.totalorder %s16, 0
      %p55 = por %p53, %p54
      %s56 = ssub.s32 %s18, %s25
      %p57 = scmp.eq.s32.totalorder %s56, 0
      %s59 = sadd.s32 %s58, 1
      %s60 = scalar_select %p57, %s58, %s59
      %p63 = pneg %p57
      %p64 = scmp.eq.s32.totalorder %s10, 2
      %p65 = por %p63, %p64
      %p66 = scmp.ne.s32.totalorder %s58, %s61
      %p67 = scmp.eq.s32.totalorder %s10, 0
      %p68 = por %p66, %p67
      %p69 = scmp.ne.s32.totalorder %s58, %s61
      %p70 = scmp.eq.s32.totalorder %s15, 2
      %p71 = por %p69, %p70
      %p72 = scmp.ne.s32.totalorder %s61, %s62
      %p73 = scmp.eq.s32.totalorder %s15, 0
      %p74 = por %p72, %p73
      %p75 = scmp.ne.s32.totalorder %s61, %s62
      %p76 = scmp.eq.s32.totalorder %s16, 2
      %p77 = por %p75, %p76
      %p79 = scmp.ne.s32.totalorder %s62, %s78
      %p80 = scmp.eq.s32.totalorder %s16, 0
      %p81 = por %p79, %p80
      %s82 = ssub.s32 %s18, %s25
      %p83 = scmp.eq.s32.totalorder %s82, 0
      %s85 = sadd.s32 %s84, 1
      %s86 = scalar_select %p83, %s84, %s85
      %p89 = pneg %p83
      %p90 = scmp.eq.s32.totalorder %s10, 2
      %p91 = por %p89, %p90
      %p92 = scmp.ne.s32.totalorder %s84, %s87
      %p93 = scmp.eq.s32.totalorder %s10, 0
      %p94 = por %p92, %p93
      %p95 = scmp.ne.s32.totalorder %s84, %s87
      %p96 = scmp.eq.s32.totalorder %s15, 2
      %p97 = por %p95, %p96
      %p98 = scmp.ne.s32.totalorder %s87, %s88
      %p99 = scmp.eq.s32.totalorder %s15, 0
      %p100 = por %p98, %p99
      %p101 = scmp.ne.s32.totalorder %s87, %s88
      %p102 = scmp.eq.s32.totalorder %s16, 2
      %p103 = por %p101, %p102
      %p105 = scmp.ne.s32.totalorder %s88, %s104
      %p106 = scmp.eq.s32.totalorder %s16, 0
      %p107 = por %p105, %p106
      %s108 = ssub.s32 %s17, %s29
      %p109 = scmp.eq.s32.totalorder %s108, 0
      %s111 = sadd.s32 %s110, 1
      %s112 = scalar_select %p109, %s110, %s111
      %p115 = pneg %p109
      %p116 = scmp.eq.s32.totalorder %s10, 2
      %p117 = por %p115, %p116
      %p118 = scmp.ne.s32.totalorder %s110, %s113
      %p119 = scmp.eq.s32.totalorder %s10, 0
      %p120 = por %p118, %p119
      %p121 = scmp.ne.s32.totalorder %s110, %s113
      %p122 = scmp.eq.s32.totalorder %s15, 2
      %p123 = por %p121, %p122
      %p124 = scmp.ne.s32.totalorder %s113, %s114
      %p125 = scmp.eq.s32.totalorder %s15, 0
      %p126 = por %p124, %p125
      %p127 = scmp.ne.s32.totalorder %s113, %s114
      %p128 = scmp.eq.s32.totalorder %s16, 2
      %p129 = por %p127, %p128
      %p131 = scmp.ne.s32.totalorder %s114, %s130
      %p132 = scmp.eq.s32.totalorder %s16, 0
      %p133 = por %p131, %p132
      %p134 = scmp.le.s32.totalorder 1, %s10
      %p135 = scmp.lt.s32.totalorder %s10, 4
      %p136 = pnand %p134, %p135
      %p137 = pneg %p136
      // Predicated region
      $region9: #{llama_mlp.1} parent=5 // pred_check
        _
      $region10: #{llama_mlp.1} parent=5 // pred_check_branch
        %139 = sbr.rel (%p136) target = $region12
      $region11: #{llama_mlp.1} parent=5 // pred_region
        %s140 = ssub.s32 %s10, 1
        // Predicated region
        $region13: #{llama_mlp.1} parent=11 // pred_check
          %p141 = pneg %p48
        $region14: #{llama_mlp.1} parent=11 // pred_check_branch
          %143 = sbr.rel (%p141) target = $region16
        $region15: #{llama_mlp.1} parent=11 // pred_region
          %s144 = smul.u32 2, %s19
          %p145 = scmp.lt.s32.totalorder %s144, 1
          %s146 = scalar_select %p145, %s144, 1
          %s147 = smul.addr %s146, 2
          %s148 = smul.addr %s147, 8
          %s149 = scalar_lea.vmem %s0, %s148
          %s150 = smul.u32 2, %s19
        $region16: #{llama_mlp.1} parent=11 // pred_fallthru
          _
      $region12: #{llama_mlp.1} parent=5 // pred_fallthru
        _
      %p151 = scmp.lt.s32.totalorder %s10, 3
      // Predicated region
      $region17: #{llama_mlp.1} parent=5 // pred_check
        %p152 = pneg %p151
      $region18: #{llama_mlp.1} parent=5 // pred_check_branch
        %154 = sbr.rel (%p152) target = $region20
      $region19: #{llama_mlp.1} parent=5 // pred_region
        // Predicated region
        $region21: #{llama_mlp.1} parent=19 // pred_check
          %p155 = pneg %p68
        $region22: #{llama_mlp.1} parent=19 // pred_check_branch
          %157 = sbr.rel (%p155) target = $region24
        $region23: #{llama_mlp.1} parent=19 // pred_region
          %s158 = sand.u32 %s58, 1
          %s159 = sand.u32 %s58, 1
          %s160 = smul.addr %s159, 512
          %s161 = scalar_lea.vmem [#allocation3], %s160
          %s162 = smul.u32 2, %s18
          %s163 = smul.addr %s162, 8
          %s164 = scalar_lea.vmem %s1, %s163
          // Predicated region
          $region25: #{llama_mlp.1} parent=23 // pred_check
            _
          $region26: #{llama_mlp.1} parent=23 // pred_check_branch
            %166 = sbr.rel (0) target = $region28
          $region27: #{llama_mlp.1} parent=23 // pred_region
            // Predicated region
            $region29: #{llama_mlp.1} parent=27 // pred_check
              _
            $region30: #{llama_mlp.1} parent=27 // pred_check_branch
              %168 = sbr.rel (0) target = $region32
            $region31: #{llama_mlp.1} parent=27 // pred_region
              loop: start=0, step=1, limit=1
              $region33: #{llama_mlp.1} parent=31 // loop_pre_header
                _
              $region34: #{llama_mlp.1} parent=31 // loop_header
                %s170 = sphi 0, %s174
                %p171 = scmp.ge.s32.totalorder %s170, 1
                %s175 = sphi %s164, %s164
                %s176 = sphi %s161, %s161
              $region35: #{llama_mlp.1} parent=31 // loop_header_branch
                %173 = sbr.rel (%p171) target = $region39
              $region36: #{llama_mlp.1} parent=31 // loop_body
                %v177 = vld [vmem:[%s175] sm:$0xff]
                %178 = vst [vmem:[%s176] sm:$0xff] %v177
                %v179 = vld [vmem:[%s175 + $0x8] sm:$0xff]
                %180 = vst [vmem:[%s176 + $0x8] sm:$0xff] %v179
                %v181 = vld [vmem:[%s175 + $0x30] sm:$0xff]
                %182 = vst [vmem:[%s176 + $0x10] sm:$0xff] %v181
                %v183 = vld [vmem:[%s175 + $0x38] sm:$0xff]
                %184 = vst [vmem:[%s176 + $0x18] sm:$0xff] %v183
                %v185 = vld [vmem:[%s175 + $0x60] sm:$0xff]
                %186 = vst [vmem:[%s176 + $0x20] sm:$0xff] %v185
                %v187 = vld [vmem:[%s175 + $0x68] sm:$0xff]
                %188 = vst [vmem:[%s176 + $0x28] sm:$0xff] %v187
                %v189 = vld [vmem:[%s175 + $0x90] sm:$0xff]
                %190 = vst [vmem:[%s176 + $0x30] sm:$0xff] %v189
                %v191 = vld [vmem:[%s175 + $0x98] sm:$0xff]
                %192 = vst [vmem:[%s176 + $0x38] sm:$0xff] %v191
                %v193 = vld [vmem:[%s175 + $0xc0] sm:$0xff]
                %194 = vst [vmem:[%s176 + $0x40] sm:$0xff] %v193
                %v195 = vld [vmem:[%s175 + $0xc8] sm:$0xff]
                %196 = vst [vmem:[%s176 + $0x48] sm:$0xff] %v195
                %v197 = vld [vmem:[%s175 + $0xf0] sm:$0xff]
                %198 = vst [vmem:[%s176 + $0x50] sm:$0xff] %v197
                %v199 = vld [vmem:[%s175 + $0xf8] sm:$0xff]
                %200 = vst [vmem:[%s176 + $0x58] sm:$0xff] %v199
                %v201 = vld [vmem:[%s175 + $0x120] sm:$0xff]
                %202 = vst [vmem:[%s176 + $0x60] sm:$0xff] %v201
                %v203 = vld [vmem:[%s175 + $0x128] sm:$0xff]
                %204 = vst [vmem:[%s176 + $0x68] sm:$0xff] %v203
                %v205 = vld [vmem:[%s175 + $0x150] sm:$0xff]
                %206 = vst [vmem:[%s176 + $0x70] sm:$0xff] %v205
                %v207 = vld [vmem:[%s175 + $0x158] sm:$0xff]
                %208 = vst [vmem:[%s176 + $0x78] sm:$0xff] %v207
                %v209 = vld [vmem:[%s175 + $0x180] sm:$0xff]
                %210 = vst [vmem:[%s176 + $0x80] sm:$0xff] %v209
                %v211 = vld [vmem:[%s175 + $0x188] sm:$0xff]
                %212 = vst [vmem:[%s176 + $0x88] sm:$0xff] %v211
                %v213 = vld [vmem:[%s175 + $0x1b0] sm:$0xff]
                %214 = vst [vmem:[%s176 + $0x90] sm:$0xff] %v213
                %v215 = vld [vmem:[%s175 + $0x1b8] sm:$0xff]
                %216 = vst [vmem:[%s176 + $0x98] sm:$0xff] %v215
                %v217 = vld [vmem:[%s175 + $0x1e0] sm:$0xff]
                %218 = vst [vmem:[%s176 + $0xa0] sm:$0xff] %v217
                %v219 = vld [vmem:[%s175 + $0x1e8] sm:$0xff]
                %220 = vst [vmem:[%s176 + $0xa8] sm:$0xff] %v219
                %v221 = vld [vmem:[%s175 + $0x210] sm:$0xff]
                %222 = vst [vmem:[%s176 + $0xb0] sm:$0xff] %v221
                %v223 = vld [vmem:[%s175 + $0x218] sm:$0xff]
                %224 = vst [vmem:[%s176 + $0xb8] sm:$0xff] %v223
                %v225 = vld [vmem:[%s175 + $0x240] sm:$0xff]
                %226 = vst [vmem:[%s176 + $0xc0] sm:$0xff] %v225
                %v227 = vld [vmem:[%s175 + $0x248] sm:$0xff]
                %228 = vst [vmem:[%s176 + $0xc8] sm:$0xff] %v227
                %v229 = vld [vmem:[%s175 + $0x270] sm:$0xff]
                %230 = vst [vmem:[%s176 + $0xd0] sm:$0xff] %v229
                %v231 = vld [vmem:[%s175 + $0x278] sm:$0xff]
                %232 = vst [vmem:[%s176 + $0xd8] sm:$0xff] %v231
                %v233 = vld [vmem:[%s175 + $0x2a0] sm:$0xff]
                %234 = vst [vmem:[%s176 + $0xe0] sm:$0xff] %v233
                %v235 = vld [vmem:[%s175 + $0x2a8] sm:$0xff]
                %236 = vst [vmem:[%s176 + $0xe8] sm:$0xff] %v235
                %v237 = vld [vmem:[%s175 + $0x2d0] sm:$0xff]
                %238 = vst [vmem:[%s176 + $0xf0] sm:$0xff] %v237
                %v239 = vld [vmem:[%s175 + $0x2d8] sm:$0xff]
                %240 = vst [vmem:[%s176 + $0xf8] sm:$0xff] %v239
                %v241 = vld [vmem:[%s175 + $0x300] sm:$0xff]
                %242 = vst [vmem:[%s176 + $0x100] sm:$0xff] %v241
                %v243 = vld [vmem:[%s175 + $0x308] sm:$0xff]
                %244 = vst [vmem:[%s176 + $0x108] sm:$0xff] %v243
                %v245 = vld [vmem:[%s175 + $0x330] sm:$0xff]
                %246 = vst [vmem:[%s176 + $0x110] sm:$0xff] %v245
                %v247 = vld [vmem:[%s175 + $0x338] sm:$0xff]
                %248 = vst [vmem:[%s176 + $0x118] sm:$0xff] %v247
                %v249 = vld [vmem:[%s175 + $0x360] sm:$0xff]
                %250 = vst [vmem:[%s176 + $0x120] sm:$0xff] %v249
                %v251 = vld [vmem:[%s175 + $0x368] sm:$0xff]
                %252 = vst [vmem:[%s176 + $0x128] sm:$0xff] %v251
                %v253 = vld [vmem:[%s175 + $0x390] sm:$0xff]
                %254 = vst [vmem:[%s176 + $0x130] sm:$0xff] %v253
                %v255 = vld [vmem:[%s175 + $0x398] sm:$0xff]
                %256 = vst [vmem:[%s176 + $0x138] sm:$0xff] %v255
                %v257 = vld [vmem:[%s175 + $0x3c0] sm:$0xff]
                %258 = vst [vmem:[%s176 + $0x140] sm:$0xff] %v257
                %v259 = vld [vmem:[%s175 + $0x3c8] sm:$0xff]
                %260 = vst [vmem:[%s176 + $0x148] sm:$0xff] %v259
                %v261 = vld [vmem:[%s175 + $0x3f0] sm:$0xff]
                %262 = vst [vmem:[%s176 + $0x150] sm:$0xff] %v261
                %v263 = vld [vmem:[%s175 + $0x3f8] sm:$0xff]
                %264 = vst [vmem:[%s176 + $0x158] sm:$0xff] %v263
                %v265 = vld [vmem:[%s175 + $0x420] sm:$0xff]
                %266 = vst [vmem:[%s176 + $0x160] sm:$0xff] %v265
                %v267 = vld [vmem:[%s175 + $0x428] sm:$0xff]
                %268 = vst [vmem:[%s176 + $0x168] sm:$0xff] %v267
                %v269 = vld [vmem:[%s175 + $0x450] sm:$0xff]
                %270 = vst [vmem:[%s176 + $0x170] sm:$0xff] %v269
                %v271 = vld [vmem:[%s175 + $0x458] sm:$0xff]
                %272 = vst [vmem:[%s176 + $0x178] sm:$0xff] %v271
                %v273 = vld [vmem:[%s175 + $0x480] sm:$0xff]
                %274 = vst [vmem:[%s176 + $0x180] sm:$0xff] %v273
                %v275 = vld [vmem:[%s175 + $0x488] sm:$0xff]
                %276 = vst [vmem:[%s176 + $0x188] sm:$0xff] %v275
                %v277 = vld [vmem:[%s175 + $0x4b0] sm:$0xff]
                %278 = vst [vmem:[%s176 + $0x190] sm:$0xff] %v277
                %v279 = vld [vmem:[%s175 + $0x4b8] sm:$0xff]
                %280 = vst [vmem:[%s176 + $0x198] sm:$0xff] %v279
                %v281 = vld [vmem:[%s175 + $0x4e0] sm:$0xff]
                %282 = vst [vmem:[%s176 + $0x1a0] sm:$0xff] %v281
                %v283 = vld [vmem:[%s175 + $0x4e8] sm:$0xff]
                %284 = vst [vmem:[%s176 + $0x1a8] sm:$0xff] %v283
                %v285 = vld [vmem:[%s175 + $0x510] sm:$0xff]
                %286 = vst [vmem:[%s176 + $0x1b0] sm:$0xff] %v285
                %v287 = vld [vmem:[%s175 + $0x518] sm:$0xff]
                %288 = vst [vmem:[%s176 + $0x1b8] sm:$0xff] %v287
                %v289 = vld [vmem:[%s175 + $0x540] sm:$0xff]
                %290 = vst [vmem:[%s176 + $0x1c0] sm:$0xff] %v289
                %v291 = vld [vmem:[%s175 + $0x548] sm:$0xff]
                %292 = vst [vmem:[%s176 + $0x1c8] sm:$0xff] %v291
                %v293 = vld [vmem:[%s175 + $0x570] sm:$0xff]
                %294 = vst [vmem:[%s176 + $0x1d0] sm:$0xff] %v293
                %v295 = vld [vmem:[%s175 + $0x578] sm:$0xff]
                %296 = vst [vmem:[%s176 + $0x1d8] sm:$0xff] %v295
                %v297 = vld [vmem:[%s175 + $0x5a0] sm:$0xff]
                %298 = vst [vmem:[%s176 + $0x1e0] sm:$0xff] %v297
                %v299 = vld [vmem:[%s175 + $0x5a8] sm:$0xff]
                %300 = vst [vmem:[%s176 + $0x1e8] sm:$0xff] %v299
                %v301 = vld [vmem:[%s175 + $0x5d0] sm:$0xff]
                %302 = vst [vmem:[%s176 + $0x1f0] sm:$0xff] %v301
                %v303 = vld [vmem:[%s175 + $0x5d8] sm:$0xff]
                %304 = vst [vmem:[%s176 + $0x1f8] sm:$0xff] %v303
              $region37: #{llama_mlp.1} parent=31 // loop_footer
                %s174 = sadd.s32 1, %s170
              $region38: #{llama_mlp.1} parent=31 // loop_footer_branch
                %169 = sbr.rel target = $region34
              $region39: #{llama_mlp.1} parent=31 // loop_exit
                _
            $region32: #{llama_mlp.1} parent=27 // pred_fallthru
              _
            // Predicated region
            $region40: #{llama_mlp.1} parent=27 // pred_check
              _
            $region41: #{llama_mlp.1} parent=27 // pred_check_branch
              %306 = sbr.rel target = $region43
            $region42: #{llama_mlp.1} parent=27 // pred_region
              _
            $region43: #{llama_mlp.1} parent=27 // pred_fallthru
              _
          $region28: #{llama_mlp.1} parent=23 // pred_fallthru
            _
          %307 = vnop
        $region24: #{llama_mlp.1} parent=19 // pred_fallthru
          _
        // Predicated region
        $region44: #{llama_mlp.1} parent=19 // pred_check
          %p308 = pneg %p94
        $region45: #{llama_mlp.1} parent=19 // pred_check_branch
          %310 = sbr.rel (%p308) target = $region47
        $region46: #{llama_mlp.1} parent=19 // pred_region
          %s311 = smul.u32 16, %s18
          %p312 = scmp.lt.s32.totalorder %s311, 47
          %s313 = scalar_select %p312, %s311, 47
          %s314 = smul.addr %s313, 2
          %s315 = smul.addr %s314, 8
          %s316 = scalar_lea.vmem %s2, %s315
          %s317 = smul.u32 16, %s18
        $region47: #{llama_mlp.1} parent=19 // pred_fallthru
          _
      $region20: #{llama_mlp.1} parent=5 // pred_fallthru
        _
      %p318 = scmp.le.s32.totalorder 1, %s10
      %p319 = scmp.lt.s32.totalorder %s10, 4
      %p320 = pnand %p318, %p319
      %p321 = pneg %p320
      // Predicated region
      $region48: #{llama_mlp.1} parent=5 // pred_check
        _
      $region49: #{llama_mlp.1} parent=5 // pred_check_branch
        %323 = sbr.rel (%p320) target = $region51
      $region50: #{llama_mlp.1} parent=5 // pred_region
        %s324 = ssub.s32 %s10, 1
        %s325 = sand.u32 %s61, 1
        %s326 = sand.u32 %s61, 1
        %s327 = smul.addr %s326, 512
        %s328 = scalar_lea.vmem [#allocation3], %s327
        // Predicated region
        $region52: #{llama_mlp.1} parent=50 // pred_check
          %p329 = pneg %p74
        $region53: #{llama_mlp.1} parent=50 // pred_check_branch
          %331 = sbr.rel (%p329) target = $region55
        $region54: #{llama_mlp.1} parent=50 // pred_region
          _
        $region55: #{llama_mlp.1} parent=50 // pred_fallthru
          _
        %s332 = smul.u32 2, %s19
        %p333 = scmp.lt.s32.totalorder %s332, 1
        %s334 = scalar_select %p333, %s332, 1
        %s335 = smul.addr %s334, 2
        %s336 = smul.addr %s335, 8
        %s337 = scalar_lea.vmem %s0, %s336
        %p338 = pneg %p48
        %p339 = pneg %p45
        %s340 = sand.u32 %s61, 1
        %s341 = sand.u32 %s61, 1
        %s342 = smul.addr %s341, 512
        %s343 = scalar_lea.vmem [#allocation3], %s342
        %p344 = pneg %p74
        %p345 = pneg %p71
        %s346 = smul.u32 16, %s20
        %p347 = scmp.lt.s32.totalorder %s346, 47
        %s348 = scalar_select %p347, %s346, 47
        %s349 = smul.addr %s348, 2
        %s350 = smul.addr %s349, 8
        %s351 = scalar_lea.vmem %s2, %s350
        %p352 = pneg %p100
        %p353 = pneg %p97
        %p354 = pneg %p126
        %p355 = pneg %p123
        %s356 = smul.u32 2, %s19
        %p357 = scmp.lt.s32.totalorder %s356, 1
        %s358 = scalar_select %p357, %s356, 1
        %s359 = smul.addr %s358, 2
        %s360 = smul.addr %s359, 8
        %s361 = scalar_lea.vmem %s0, %s360
        %s362 = smul.u32 2, %s19
        %s363 = smul.u32 2, %s20
        %s364 = smul.u32 16, %s20
        %p365 = scmp.lt.s32.totalorder %s364, 47
        %s366 = scalar_select %p365, %s364, 47
        %s367 = smul.addr %s366, 2
        %s368 = smul.addr %s367, 8
        %s369 = scalar_lea.vmem %s2, %s368
        %s370 = smul.u32 16, %s20
        %s371 = smul.u32 2, %s19
        %p372 = scmp.eq.s32.totalorder %s20, 0
        // Predicated region
        $region56: #{llama_mlp.1} parent=50 // pred_check
          %p373 = pneg %p372
        $region57: #{llama_mlp.1} parent=50 // pred_check_branch
          %375 = sbr.rel (%p373) target = $region59
        $region58: #{llama_mlp.1} parent=50 // pred_region
          %376 = vst [vmem:[#allocation2] sm:$0xff] 0.0
          %377 = vst [vmem:[#allocation2 + $0x8] sm:$0xff] 0.0
          %378 = vst [vmem:[#allocation2 + $0x10] sm:$0xff] 0.0
          %379 = vst [vmem:[#allocation2 + $0x18] sm:$0xff] 0.0
        $region59: #{llama_mlp.1} parent=50 // pred_fallthru
          _
        %v380 = vld [vmem:[%s361] sm:$0xff]
        %v381 = vld [vmem:[%s361 + $0x8] sm:$0xff]
        %v382 = vld [vmem:[%s361 + $0x10] sm:$0xff]
        %v383 = vld [vmem:[%s361 + $0x18] sm:$0xff]
        %v384 = vld [vmem:[%s328] sm:$0xff]
        %v385 = vld [vmem:[%s328 + $0x8] sm:$0xff]
        %v386 = vld [vmem:[%s328 + $0x10] sm:$0xff]
        %v387 = vld [vmem:[%s328 + $0x18] sm:$0xff]
        %v388 = vld [vmem:[%s328 + $0x20] sm:$0xff]
        %v389 = vld [vmem:[%s328 + $0x28] sm:$0xff]
        %v390 = vld [vmem:[%s328 + $0x30] sm:$0xff]
        %v391 = vld [vmem:[%s328 + $0x38] sm:$0xff]
        %v392 = vld [vmem:[%s328 + $0x40] sm:$0xff]
        %v393 = vld [vmem:[%s328 + $0x48] sm:$0xff]
        %v394 = vld [vmem:[%s328 + $0x50] sm:$0xff]
        %v395 = vld [vmem:[%s328 + $0x58] sm:$0xff]
        %v396 = vld [vmem:[%s328 + $0x60] sm:$0xff]
        %v397 = vld [vmem:[%s328 + $0x68] sm:$0xff]
        %v398 = vld [vmem:[%s328 + $0x70] sm:$0xff]
        %v399 = vld [vmem:[%s328 + $0x78] sm:$0xff]
        %v400 = vld [vmem:[%s328 + $0x80] sm:$0xff]
        %v401 = vld [vmem:[%s328 + $0x88] sm:$0xff]
        %v402 = vld [vmem:[%s328 + $0x90] sm:$0xff]
        %v403 = vld [vmem:[%s328 + $0x98] sm:$0xff]
        %v404 = vld [vmem:[%s328 + $0xa0] sm:$0xff]
        %v405 = vld [vmem:[%s328 + $0xa8] sm:$0xff]
        %v406 = vld [vmem:[%s328 + $0xb0] sm:$0xff]
        %v407 = vld [vmem:[%s328 + $0xb8] sm:$0xff]
        %v408 = vld [vmem:[%s328 + $0xc0] sm:$0xff]
        %v409 = vld [vmem:[%s328 + $0xc8] sm:$0xff]
        %v410 = vld [vmem:[%s328 + $0xd0] sm:$0xff]
        %v411 = vld [vmem:[%s328 + $0xd8] sm:$0xff]
        %v412 = vld [vmem:[%s328 + $0xe0] sm:$0xff]
        %v413 = vld [vmem:[%s328 + $0xe8] sm:$0xff]
        %v414 = vld [vmem:[%s328 + $0xf0] sm:$0xff]
        %v415 = vld [vmem:[%s328 + $0xf8] sm:$0xff]
        %v416 = vld [vmem:[%s328 + $0x100] sm:$0xff]
        %v417 = vld [vmem:[%s328 + $0x108] sm:$0xff]
        %v418 = vld [vmem:[%s328 + $0x110] sm:$0xff]
        %v419 = vld [vmem:[%s328 + $0x118] sm:$0xff]
        %v420 = vld [vmem:[%s328 + $0x120] sm:$0xff]
        %v421 = vld [vmem:[%s328 + $0x128] sm:$0xff]
        %v422 = vld [vmem:[%s328 + $0x130] sm:$0xff]
        %v423 = vld [vmem:[%s328 + $0x138] sm:$0xff]
        %v424 = vld [vmem:[%s328 + $0x140] sm:$0xff]
        %v425 = vld [vmem:[%s328 + $0x148] sm:$0xff]
        %v426 = vld [vmem:[%s328 + $0x150] sm:$0xff]
        %v427 = vld [vmem:[%s328 + $0x158] sm:$0xff]
        %v428 = vld [vmem:[%s328 + $0x160] sm:$0xff]
        %v429 = vld [vmem:[%s328 + $0x168] sm:$0xff]
        %v430 = vld [vmem:[%s328 + $0x170] sm:$0xff]
        %v431 = vld [vmem:[%s328 + $0x178] sm:$0xff]
        %v432 = vld [vmem:[%s328 + $0x180] sm:$0xff]
        %v433 = vld [vmem:[%s328 + $0x188] sm:$0xff]
        %v434 = vld [vmem:[%s328 + $0x190] sm:$0xff]
        %v435 = vld [vmem:[%s328 + $0x198] sm:$0xff]
        %v436 = vld [vmem:[%s328 + $0x1a0] sm:$0xff]
        %v437 = vld [vmem:[%s328 + $0x1a8] sm:$0xff]
        %v438 = vld [vmem:[%s328 + $0x1b0] sm:$0xff]
        %v439 = vld [vmem:[%s328 + $0x1b8] sm:$0xff]
        %v440 = vld [vmem:[%s328 + $0x1c0] sm:$0xff]
        %v441 = vld [vmem:[%s328 + $0x1c8] sm:$0xff]
        %v442 = vld [vmem:[%s328 + $0x1d0] sm:$0xff]
        %v443 = vld [vmem:[%s328 + $0x1d8] sm:$0xff]
        %v444 = vld [vmem:[%s328 + $0x1e0] sm:$0xff]
        %v445 = vld [vmem:[%s328 + $0x1e8] sm:$0xff]
        %v446 = vld [vmem:[%s328 + $0x1f0] sm:$0xff]
        %v447 = vld [vmem:[%s328 + $0x1f8] sm:$0xff]
        %448 = vmatprep.subr.mxu0 %v385
        %449 = vmatpush1.msra.mxu0 %v384
        %450 = vmatprep.subr.mxu0 %v387
        %451 = vmatpush1.msra.mxu0 %v386
        %452 = vmatprep.subr.mxu0 %v389
        %453 = vmatpush1.msra.mxu0 %v388
        %454 = vmatprep.subr.mxu0 %v391
        %455 = vmatpush1.msra.mxu0 %v390
        %456 = vmatprep.subr.mxu0 %v393
        %457 = vmatpush1.msra.mxu0 %v392
        %458 = vmatprep.subr.mxu0 %v395
        %459 = vmatpush1.msra.mxu0 %v394
        %460 = vmatprep.subr.mxu0 %v397
        %461 = vmatpush1.msra.mxu0 %v396
        %462 = vmatprep.subr.mxu0 %v399
        %463 = vmatpush1.msra.mxu0 %v398
        %464 = vmatprep.subr.mxu0 %v401
        %465 = vmatpush1.msra.mxu0 %v400
        %466 = vmatprep.subr.mxu0 %v403
        %467 = vmatpush1.msra.mxu0 %v402
        %468 = vmatprep.subr.mxu0 %v405
        %469 = vmatpush1.msra.mxu0 %v404
        %470 = vmatprep.subr.mxu0 %v407
        %471 = vmatpush1.msra.mxu0 %v406
        %472 = vmatprep.subr.mxu0 %v409
        %473 = vmatpush1.msra.mxu0 %v408
        %474 = vmatprep.subr.mxu0 %v411
        %475 = vmatpush1.msra.mxu0 %v410
        %476 = vmatprep.subr.mxu0 %v413
        %477 = vmatpush1.msra.mxu0 %v412
        %478 = vmatprep.subr.mxu0 %v415
        %479 = vmatpush1.msra.mxu0 %v414
        %480 = vmatprep.subr.mxu0 %v417
        %481 = vmatpush1.msra.mxu0 %v416
        %482 = vmatprep.subr.mxu0 %v419
        %483 = vmatpush1.msra.mxu0 %v418
        %484 = vmatprep.subr.mxu0 %v421
        %485 = vmatpush1.msra.mxu0 %v420
        %486 = vmatprep.subr.mxu0 %v423
        %487 = vmatpush1.msra.mxu0 %v422
        %488 = vmatprep.subr.mxu0 %v425
        %489 = vmatpush1.msra.mxu0 %v424
        %490 = vmatprep.subr.mxu0 %v427
        %491 = vmatpush1.msra.mxu0 %v426
        %492 = vmatprep.subr.mxu0 %v429
        %493 = vmatpush1.msra.mxu0 %v428
        %494 = vmatprep.subr.mxu0 %v431
        %495 = vmatpush1.msra.mxu0 %v430
        %496 = vmatprep.subr.mxu0 %v433
        %497 = vmatpush1.msra.mxu0 %v432
        %498 = vmatprep.subr.mxu0 %v435
        %499 = vmatpush1.msra.mxu0 %v434
        %500 = vmatprep.subr.mxu0 %v437
        %501 = vmatpush1.msra.mxu0 %v436
        %502 = vmatprep.subr.mxu0 %v439
        %503 = vmatpush1.msra.mxu0 %v438
        %504 = vmatprep.subr.mxu0 %v441
        %505 = vmatpush1.msra.mxu0 %v440
        %506 = vmatprep.subr.mxu0 %v443
        %507 = vmatpush1.msra.mxu0 %v442
        %508 = vmatprep.subr.mxu0 %v445
        %509 = vmatpush1.msra.mxu0 %v444
        %510 = vmatprep.subr.mxu0 %v447
        %511 = vmatpush1.msra.mxu0 %v446
        %512 = vmatprep.mubr.f32.mxu0 %v381
        %513 = vmatmul.mubr.f32.gmra.mrb[0].mxu0 %v380
        %v514 = vpop.f32.mrb[0].mxu0
        %v515 = vadd.f32 0.0, %v514
        %v516 = vpop.f32.mrb[0].mxu0
        %v517 = vadd.f32 0.0, %v516
        %518 = vmatprep.mubr.f32.mxu0 %v383
        %519 = vmatmul.mubr.f32.gmra.mrb[0].mxu0 %v382
        %v520 = vpop.f32.mrb[0].mxu0
        %v521 = vadd.f32 0.0, %v520
        %v522 = vpop.f32.mrb[0].mxu0
        %v523 = vadd.f32 0.0, %v522
        %524 = vdwg.mxu0
        %v525 = vxor.u32 %v515, 2147483648
        %v526 = vxor.u32 %v521, 2147483648
        %v527 = vmul.f32 %v525, 1.442695
        %v528 = vpow.pop %v527
        %v529 = vmul.f32 %v526, 1.442695
        %v530 = vpow.pop %v529
        %v531 = vadd.f32 %v528, 1.0
        %v532 = vadd.f32 %v530, 1.0
        %v533 = vrcp.pop %v531
        %v534 = vmul.f32 1.0, %v533
        %v535 = vrcp.pop %v532
        %v536 = vmul.f32 1.0, %v535
        %v537 = vmul.f32 %v515, %v534
        %v538 = vmul.f32 %v521, %v536
        %v539 = vmul.f32 %v537, %v517
        %v540 = vmul.f32 %v538, %v523
        %v541 = vld [vmem:[#allocation2] sm:$0xff]
        %v542 = vld [vmem:[#allocation2 + $0x8] sm:$0xff]
        %v543 = vld [vmem:[#allocation2 + $0x10] sm:$0xff]
        %v544 = vld [vmem:[#allocation2 + $0x18] sm:$0xff]
        %v545 = vld [vmem:[%s369] sm:$0xff]
        %v546 = vld [vmem:[%s369 + $0x8] sm:$0xff]
        %v547 = vld [vmem:[%s369 + $0x10] sm:$0xff]
        %v548 = vld [vmem:[%s369 + $0x18] sm:$0xff]
        %v549 = vld [vmem:[%s369 + $0x20] sm:$0xff]
        %v550 = vld [vmem:[%s369 + $0x28] sm:$0xff]
        %v551 = vld [vmem:[%s369 + $0x30] sm:$0xff]
        %v552 = vld [vmem:[%s369 + $0x38] sm:$0xff]
        %v553 = vld [vmem:[%s369 + $0x40] sm:$0xff]
        %v554 = vld [vmem:[%s369 + $0x48] sm:$0xff]
        %v555 = vld [vmem:[%s369 + $0x50] sm:$0xff]
        %v556 = vld [vmem:[%s369 + $0x58] sm:$0xff]
        %v557 = vld [vmem:[%s369 + $0x60] sm:$0xff]
        %v558 = vld [vmem:[%s369 + $0x68] sm:$0xff]
        %v559 = vld [vmem:[%s369 + $0x70] sm:$0xff]
        %v560 = vld [vmem:[%s369 + $0x78] sm:$0xff]
        %v561 = vld [vmem:[%s369 + $0x80] sm:$0xff]
        %v562 = vld [vmem:[%s369 + $0x88] sm:$0xff]
        %v563 = vld [vmem:[%s369 + $0x90] sm:$0xff]
        %v564 = vld [vmem:[%s369 + $0x98] sm:$0xff]
        %v565 = vld [vmem:[%s369 + $0xa0] sm:$0xff]
        %v566 = vld [vmem:[%s369 + $0xa8] sm:$0xff]
        %v567 = vld [vmem:[%s369 + $0xb0] sm:$0xff]
        %v568 = vld [vmem:[%s369 + $0xb8] sm:$0xff]
        %v569 = vld [vmem:[%s369 + $0xc0] sm:$0xff]
        %v570 = vld [vmem:[%s369 + $0xc8] sm:$0xff]
        %v571 = vld [vmem:[%s369 + $0xd0] sm:$0xff]
        %v572 = vld [vmem:[%s369 + $0xd8] sm:$0xff]
        %v573 = vld [vmem:[%s369 + $0xe0] sm:$0xff]
        %v574 = vld [vmem:[%s369 + $0xe8] sm:$0xff]
        %v575 = vld [vmem:[%s369 + $0xf0] sm:$0xff]
        %v576 = vld [vmem:[%s369 + $0xf8] sm:$0xff]
        %577 = vmatprep.subr.mxu0 %v546
        %578 = vmatpush1.msra.mxu0 %v545
        %579 = vmatprep.subr.mxu0 %v548
        %580 = vmatpush1.msra.mxu0 %v547
        %581 = vmatprep.subr.mxu0 %v550
        %582 = vmatpush1.msra.mxu0 %v549
        %583 = vmatprep.subr.mxu0 %v552
        %584 = vmatpush1.msra.mxu0 %v551
        %585 = vmatprep.subr.mxu0 %v554
        %586 = vmatpush1.msra.mxu0 %v553
        %587 = vmatprep.subr.mxu0 %v556
        %588 = vmatpush1.msra.mxu0 %v555
        %589 = vmatprep.subr.mxu0 %v558
        %590 = vmatpush1.msra.mxu0 %v557
        %591 = vmatprep.subr.mxu0 %v560
        %592 = vmatpush1.msra.mxu0 %v559
        %593 = vmatprep.subr.mxu0 %v562
        %594 = vmatpush1.msra.mxu0 %v561
        %595 = vmatprep.subr.mxu0 %v564
        %596 = vmatpush1.msra.mxu0 %v563
        %597 = vmatprep.subr.mxu0 %v566
        %598 = vmatpush1.msra.mxu0 %v565
        %599 = vmatprep.subr.mxu0 %v568
        %600 = vmatpush1.msra.mxu0 %v567
        %601 = vmatprep.subr.mxu0 %v570
        %602 = vmatpush1.msra.mxu0 %v569
        %603 = vmatprep.subr.mxu0 %v572
        %604 = vmatpush1.msra.mxu0 %v571
        %605 = vmatprep.subr.mxu0 %v574
        %606 = vmatpush1.msra.mxu0 %v573
        %607 = vmatprep.subr.mxu0 %v576
        %608 = vmatpush1.msra.mxu0 %v575
        %609 = vmatprep.subr.mxu0 0.0
        %610 = vmatpush1.msra.mxu0 0.0
        %611 = vmatprep.subr.mxu0 0.0
        %612 = vmatpush1.msra.mxu0 0.0
        %613 = vmatprep.subr.mxu0 0.0
        %614 = vmatpush1.msra.mxu0 0.0
        %615 = vmatprep.subr.mxu0 0.0
        %616 = vmatpush1.msra.mxu0 0.0
        %617 = vmatprep.subr.mxu0 0.0
        %618 = vmatpush1.msra.mxu0 0.0
        %619 = vmatprep.subr.mxu0 0.0
        %620 = vmatpush1.msra.mxu0 0.0
        %621 = vmatprep.subr.mxu0 0.0
        %622 = vmatpush1.msra.mxu0 0.0
        %623 = vmatprep.subr.mxu0 0.0
        %624 = vmatpush1.msra.mxu0 0.0
        %625 = vmatprep.subr.mxu0 0.0
        %626 = vmatpush1.msra.mxu0 0.0
        %627 = vmatprep.subr.mxu0 0.0
        %628 = vmatpush1.msra.mxu0 0.0
        %629 = vmatprep.subr.mxu0 0.0
        %630 = vmatpush1.msra.mxu0 0.0
        %631 = vmatprep.subr.mxu0 0.0
        %632 = vmatpush1.msra.mxu0 0.0
        %633 = vmatprep.subr.mxu0 0.0
        %634 = vmatpush1.msra.mxu0 0.0
        %635 = vmatprep.subr.mxu0 0.0
        %636 = vmatpush1.msra.mxu0 0.0
        %637 = vmatprep.subr.mxu0 0.0
        %638 = vmatpush1.msra.mxu0 0.0
        %639 = vmatprep.subr.mxu0 0.0
        %640 = vmatpush1.msra.mxu0 0.0
        %641 = vmatprep.mubr.f32.mxu0 0.0
        %642 = vmatmul.mubr.f32.gmra.mrb[0].mxu0 %v539
        %v643 = vpop.f32.mrb[0].mxu0
        %v644 = vadd.f32 0.0, %v643
        %v645 = vpop.f32.mrb[0].mxu0
        %v646 = vadd.f32 0.0, %v645
        %647 = vmatprep.mubr.f32.mxu0 0.0
        %648 = vmatmul.mubr.f32.gmra.mrb[0].mxu0 %v540
        %v649 = vpop.f32.mrb[0].mxu0
        %v650 = vadd.f32 0.0, %v649
        %v651 = vpop.f32.mrb[0].mxu0
        %v652 = vadd.f32 0.0, %v651
        %653 = vdwg.mxu0
        %v654 = vadd.f32 %v541, %v644
        %v655 = vadd.f32 %v542, %v646
        %v656 = vadd.f32 %v543, %v650
        %v657 = vadd.f32 %v544, %v652
        %658 = vst [vmem:[#allocation2] sm:$0xff] %v654
        %659 = vst [vmem:[#allocation2 + $0x8] sm:$0xff] %v655
        %660 = vst [vmem:[#allocation2 + $0x10] sm:$0xff] %v656
        %661 = vst [vmem:[#allocation2 + $0x18] sm:$0xff] %v657
        %p662 = scmp.eq.s32.totalorder %s20, 2
        // Predicated region
        $region60: #{llama_mlp.1} parent=50 // pred_check
          %p663 = pneg %p662
        $region61: #{llama_mlp.1} parent=50 // pred_check_branch
          %665 = sbr.rel (%p663) target = $region63
        $region62: #{llama_mlp.1} parent=50 // pred_region
          %v666 = vld [vmem:[#allocation2] sm:$0xff]
          %v667 = vld [vmem:[#allocation2 + $0x8] sm:$0xff]
          %v668 = vld [vmem:[#allocation2 + $0x10] sm:$0xff]
          %v669 = vld [vmem:[#allocation2 + $0x18] sm:$0xff]
          %670 = vst [vmem:[#allocation4] sm:$0xff] %v666
          %671 = vst [vmem:[#allocation4 + $0x8] sm:$0xff] %v667
          %672 = vst [vmem:[#allocation4 + $0x10] sm:$0xff] %v668
          %673 = vst [vmem:[#allocation4 + $0x18] sm:$0xff] %v669
        $region63: #{llama_mlp.1} parent=50 // pred_fallthru
          _
        // Predicated region
        $region64: #{llama_mlp.1} parent=50 // pred_check
          %p674 = pneg %p123
        $region65: #{llama_mlp.1} parent=50 // pred_check_branch
          %676 = sbr.rel (%p674) target = $region67
        $region66: #{llama_mlp.1} parent=50 // pred_region
          %s677 = smul.u32 2, %s19
          %s679 = ssub.s32 512, 512
          %680 = vsyncadd [#allocation5], %s679
          %s681 = smul.addr %s677, 2
          %s682 = smul.addr %s681, 128
          %s683 = scalar_lea.hbm %s3, %s682
          %s684 = sshll.u32 [#allocation4], 4
          %s685 = int_to_ptr.vmem [resolvable:$true] %s684
          %690 = dma.vmem_to_hbm [thread:$0]  %s685, 512, %s683, [#allocation5], 256, 256, 16
        $region67: #{llama_mlp.1} parent=50 // pred_fallthru
          _
        // Predicated region
        $region68: #{llama_mlp.1} parent=50 // pred_check
          %p691 = pneg %p123
        $region69: #{llama_mlp.1} parent=50 // pred_check_branch
          %693 = sbr.rel (%p691) target = $region71
        $region70: #{llama_mlp.1} parent=50 // pred_region
          %694 = dma.done [#allocation5], 512
        $region71: #{llama_mlp.1} parent=50 // pred_fallthru
          _
      $region51: #{llama_mlp.1} parent=5 // pred_fallthru
        _
      %p695 = scmp.le.s32.totalorder 2, %s10
      // Predicated region
      $region72: #{llama_mlp.1} parent=5 // pred_check
        %p696 = pneg %p695
      $region73: #{llama_mlp.1} parent=5 // pred_check_branch
        %698 = sbr.rel (%p696) target = $region75
      $region74: #{llama_mlp.1} parent=5 // pred_region
        %s699 = ssub.s32 %s10, 2
      $region75: #{llama_mlp.1} parent=5 // pred_fallthru
        _
    $region6: #{llama_mlp.1} parent=1 // loop_footer
      %s14 = sadd.s32 1, %s10
    $region7: #{llama_mlp.1} parent=1 // loop_footer_branch
      %9 = sbr.rel target = $region3
    $region8: #{llama_mlp.1} parent=1 // loop_exit
      _
    %700 = vsyncpa [#allocation5], 1
    %s701 = scalar_lea.sflag [#allocation5], 1
    %702 = vsyncpa %s701, 1

</llo_original>
